<compile_context>
chip_gen: v7x
topology: tpu7x:2x2x1
jax: 0.10.0
libtpu: 0.0.40
codegen_flags: <defaults>
</compile_context>

<pallas_src>
import math

import jax
import jax.numpy as jnp
import numpy as np
from jax.experimental import pallas as pl
from jax.experimental.pallas import tpu as pltpu


def _attribution_embedding_kernel(ids_ref, out_ref):
    # ids_ref: (rows_in, 1) int32 — resident ids column (sublane axis = rows,
    #          constant block index, DMA'd once for the whole grid).
    # out_ref: (block_rows, d_model) int32 — lane-dense output block with
    #          block_rows % rows_in == 0 (guaranteed by the wrapper).
    rows_in = ids_ref.shape[0]
    rows_out, d = out_ref.shape
    reps = rows_out // rows_in  # static Python int
    # Unrolled static loop: each iteration lane-broadcasts the small ids
    # column straight into a rows_in-row stripe of the output block (no
    # cross-lane XLU traffic, no large live intermediates). All of this
    # VPU/store work is hidden under the output HBM writeback DMA.
    for r in range(reps):
        out_ref[r * rows_in:(r + 1) * rows_in, :] = jnp.broadcast_to(
            ids_ref[...], (rows_in, d))


def _default_block_bytes() -> int:
    """Generation-aware output-block budget (bytes)."""
    try:
        kind = jax.devices()[0].device_kind.lower()
    except Exception:  # pragma: no cover - defensive
        return 8 * 1024 * 1024
    if "v7" in kind:
        # v7x: 64 MiB VMEM/TC -> 2x12 MiB output buffers + resident ids fits
        # comfortably under an explicit ~28 MiB scoped limit.
        return 12 * 1024 * 1024
    # v5e / v6e: 128 MiB VMEM -> 16 MiB blocks keep per-step overhead <3%.
    return 16 * 1024 * 1024


def attribution_embedding(attribution_ids: jnp.ndarray,
                          batch_size: int,
                          d_model: int,
                          *, block_bytes: int | None = None) -> jnp.ndarray:
    """Pallas equivalent of AttributionEmbedding.forward(batch_size, seq_len, device).

    In the PyTorch module, expand(batch_size, seq_len, d_model) only succeeds
    when seq_len == len(Attribution_ids), so seq_len is taken from the ids.
    Returns int32 instead of torch's int64 (values 0..5 are exact).
    """
    if block_bytes is None:
        block_bytes = _default_block_bytes()

    seq_len = int(attribution_ids.shape[0])
    total_rows = batch_size * seq_len
    row_bytes = d_model * jnp.dtype(jnp.int32).itemsize
    total_bytes = total_rows * row_bytes

    # A "unit" of rows is both 8-aligned (sublane tiling) and seq_len-periodic,
    # so any block made of whole units starts at a row ≡ 0 (mod seq_len) and
    # can reuse one resident ids block of `unit` rows.
    unit = (seq_len * 8) // math.gcd(seq_len, 8)  # lcm(8, seq_len)
    units_total = total_rows // unit

    if total_bytes <= block_bytes or units_total < 2:
        # Tiny / single-block case: one full block, grid of 1, no tiling
        # overhead. ids block is the full B-tiled pattern (reps == 1).
        block_rows = total_rows
        ids_rows = total_rows
    else:
        # Tile into >=2 (preferably an even number of) near-equal, unit-aligned
        # blocks so both v7x TCs share the writeback and every full block's
        # stores are 8-aligned and unmasked (only a possible small tail block
        # is masked, and it is still correct since it starts ≡ 0 mod seq_len).
        unit_bytes = unit * row_bytes
        budget_units = max(1, block_bytes // unit_bytes)
        n_blocks = max(2, pl.cdiv(units_total, budget_units))
        if n_blocks % 2:
            n_blocks += 1
        units_per_block = max(1, pl.cdiv(units_total, n_blocks))
        block_rows = units_per_block * unit
        ids_rows = unit

    assert block_rows % ids_rows == 0
    assert ids_rows % seq_len == 0
    grid_steps = pl.cdiv(total_rows, block_rows)

    # Resident ids column: the seq_len pattern tiled to ids_rows rows, with
    # rows on the sublane axis so the d_model broadcast is a pure lane fill.
    ids_block = jnp.tile(attribution_ids.astype(jnp.int32),
                         ids_rows // seq_len).reshape(ids_rows, 1)

    # Explicit VMEM budget: 2x output block (double-buffered) + 2x lane-padded
    # ids block + headroom. (The ids block is tiny: ids_rows*128*4 bytes.)
    out_block_bytes = block_rows * row_bytes
    ids_vmem_bytes = ids_rows * 128 * 4
    vmem_limit = max(16 * 1024 * 1024,
                     2 * out_block_bytes + 2 * ids_vmem_bytes + (2 << 20))

    cost = pl.CostEstimate(
        flops=0,
        transcendentals=0,
        bytes_accessed=total_rows * row_bytes + ids_rows * 4,
    )

    out2d = pl.pallas_call(
        _attribution_embedding_kernel,
        out_shape=jax.ShapeDtypeStruct((total_rows, d_model), jnp.int32),
        grid=(grid_steps,),
        in_specs=[
            # Constant block index -> DMA'd once, stays resident in VMEM.
            pl.BlockSpec((ids_rows, 1), lambda i: (0, 0)),
        ],
        out_specs=pl.BlockSpec((block_rows, d_model), lambda i: (i, 0)),
        compiler_params=pltpu.CompilerParams(
            dimension_semantics=("parallel",),
            vmem_limit_bytes=int(vmem_limit),
        ),
        cost_estimate=cost,
    )(ids_block)

    # Metadata-only reshape back to (B, S, D) — free.
    return out2d.reshape(batch_size, seq_len, d_model)


if __name__ == "__main__":
    # Deterministic setup (PRNGKey present per convention; the module's input
    # is a fixed constant buffer, so no random draws are needed).
    _ = jax.random.PRNGKey(0)

    d_model = 256
    attribution_ids = jnp.asarray(
        [5] * 9 + [4] * 6 + [3] * 16 + [2] * 8 + [1] * 6 + [0] * 10,
        dtype=jnp.int32)                      # length 55
    batch_size = 2
    seq_len = int(attribution_ids.shape[0])   # forward requires seq_len == 55

    out = attribution_embedding(attribution_ids, batch_size, d_model)
    out = jax.block_until_ready(out)

    # Reference (pure numpy, mirrors the PyTorch expand semantics).
    ids_np = np.asarray(attribution_ids)
    ref = np.broadcast_to(ids_np[None, :, None],
                          (batch_size, seq_len, d_model)).astype(np.int32)

    assert out.shape == (batch_size, seq_len, d_model), out.shape
    assert out.dtype == jnp.int32, out.dtype
    np.testing.assert_array_equal(np.asarray(out), ref)

    # Also exercise the tiled (multi-block, resident-ids) path once to make
    # sure the constant-index ids block and unit-aligned tiling are correct.
    big_batch = 512   # 512*55*256*4B ≈ 28.8 MB -> >=2 parallel grid steps
    out_big = jax.block_until_ready(
        attribution_embedding(attribution_ids, big_batch, d_model))
    ref_big = np.broadcast_to(ids_np[None, :, None],
                              (big_batch, seq_len, d_model)).astype(np.int32)
    np.testing.assert_array_equal(np.asarray(out_big), ref_big)

    print("KERNEL_OK")
</pallas_src>

<mosaic_0001>
module attributes {stable_mosaic.version = 11 : i64} {
  func.func @_attribution_embedding_kernel(%arg0: i32, %arg1: memref<110x1xi32, #tpu.memory_space<vmem>>, %arg2: memref<110x256xi32, #tpu.memory_space<vmem>>) attributes {dimension_semantics = [#tpu.dimension_semantics<parallel>], iteration_bounds = array<i64: 1>, scalar_prefetch = 0 : i64, scratch_operands = 0 : i64, tpu.core_type = #tpu.core_type<tc>, window_params = [{pipeline_mode = #tpu.pipeline_mode<synchronous>, transform_indices = @transform_0, window_bounds = array<i64: 110, 1>}, {transform_indices = @transform_1, window_bounds = array<i64: 110, 256>}]} {
    %c0 = arith.constant 0 : index
    %c0_0 = arith.constant 0 : index
    %0 = vector.load %arg1[%c0, %c0_0] : memref<110x1xi32, #tpu.memory_space<vmem>>, vector<110x1xi32>
    %1 = vector.shape_cast %0 : vector<110x1xi32> to vector<110x1xi32>
    %2 = vector.broadcast %1 : vector<110x1xi32> to vector<110x256xi32>
    %c0_1 = arith.constant 0 : index
    %c0_2 = arith.constant 0 : index
    %3 = vector.load %arg2[%c0_1, %c0_2] : memref<110x256xi32, #tpu.memory_space<vmem>>, vector<110x256xi32>
    tpu.vector_store %arg2[%c0_1, %c0_2], %2 {strides = array<i32>} : memref<110x256xi32, #tpu.memory_space<vmem>>, vector<110x256xi32>,
    return
  }
  func.func @transform_0(%arg0: i32) -> (i32, i32) {
    %c0_i32 = arith.constant 0 : i32
    %c0_i32_0 = arith.constant 0 : i32
    %c0_i32_1 = arith.constant 0 : i32
    return %c0_i32, %c0_i32_0 : i32, i32
  }
  func.func @transform_1(%arg0: i32) -> (i32, i32) {
    %c0_i32 = arith.constant 0 : i32
    %c0_i32_0 = arith.constant 0 : i32
    return %arg0, %c0_i32 : i32, i32
  }
}

</mosaic_0001>

<llo_original>
// kernel: tpu_custom_call.1
$region0: #{tpu_custom_call.1}
  #allocation0 [shape = 'u32[]', space=smem, size = 0x4, offset = 0x4, fixed_abs, tag = 'smem constant byte address 0x4 - core index']
  #allocation1 [shape = 'u32[144,128]{1,0:T(1,128)}', space=vmem, size = 0x12000, scoped, tag = 'internal scratch']
  %s0 = inlined_call_operand.vmem [shape: s32[110,1], index: 0, kind: input, shape index: {}]
  %s1 = inlined_call_operand.hbm [shape: s32[110,256], index: 1, kind: output, shape index: {}]
  %s2 = sld [smem:[#allocation0]]
  $region14: #{tpu_custom_call.1} parent=0
    _
  %s4 = ssub.s32 1, %s2
  %s5 = scalar_select 0, %s4, %s2
  $region1: #{tpu_custom_call.1} parent=0
    #allocation2 [shape = 'u8[114688]{0}', space=vmem, size = 0x1c000, scoped, tag = 'output window, operand 0, single buffered']
    #allocation3 [shape = 's32[1]{0}', space=sflag, size = 0x4, scoped, tag = 'scoped memory for tpu_custom_call.1']
    %6 = vsyncpa [#allocation3], 0
    // Predicated region
    $region2: #{tpu_custom_call.1} parent=1 // pred_check
      _
    $region3: #{tpu_custom_call.1} parent=1 // pred_check_branch
      %8 = sbr.rel (0) target = $region5
    $region4: #{tpu_custom_call.1} parent=1 // pred_region
      _
    $region5: #{tpu_custom_call.1} parent=1 // pred_fallthru
      _
    %v9 = vld [vmem:[%s0] sm:$0xff]
    %v10 = vld [vmem:[%s0 + $0x8] sm:$0xff]
    %v11 = vld [vmem:[%s0 + $0x10] sm:$0xff]
    %v12 = vld [vmem:[%s0 + $0x18] sm:$0xff]
    %v13 = vld [vmem:[%s0 + $0x20] sm:$0xff]
    %v14 = vld [vmem:[%s0 + $0x28] sm:$0xff]
    %v15 = vld [vmem:[%s0 + $0x30] sm:$0xff]
    %v16 = vld [vmem:[%s0 + $0x38] sm:$0xff]
    %v17 = vld [vmem:[%s0 + $0x40] sm:$0xff]
    %v18 = vld [vmem:[%s0 + $0x48] sm:$0xff]
    %v19 = vld [vmem:[%s0 + $0x50] sm:$0xff]
    %v20 = vld [vmem:[%s0 + $0x58] sm:$0xff]
    %v21 = vld [vmem:[%s0 + $0x60] sm:$0xff]
    %v22 = vld [vmem:[%s0 + $0x68] sm:$0x3f]
    %23 = vset.pattern.permute.xlu0 0
    %24 = vperm.xlu0 %23, %v9
    %v25 = vpop.permute.xlu0 %24
    %26 = vset.pattern.permute.xlu0 0
    %27 = vperm.xlu0 %26, %v10
    %v28 = vpop.permute.xlu0 %27
    %29 = vset.pattern.permute.xlu0 0
    %30 = vperm.xlu0 %29, %v11
    %v31 = vpop.permute.xlu0 %30
    %32 = vset.pattern.permute.xlu0 0
    %33 = vperm.xlu0 %32, %v12
    %v34 = vpop.permute.xlu0 %33
    %35 = vset.pattern.permute.xlu0 0
    %36 = vperm.xlu0 %35, %v13
    %v37 = vpop.permute.xlu0 %36
    %38 = vset.pattern.permute.xlu0 0
    %39 = vperm.xlu0 %38, %v14
    %v40 = vpop.permute.xlu0 %39
    %41 = vset.pattern.permute.xlu0 0
    %42 = vperm.xlu0 %41, %v15
    %v43 = vpop.permute.xlu0 %42
    %44 = vset.pattern.permute.xlu0 0
    %45 = vperm.xlu0 %44, %v16
    %v46 = vpop.permute.xlu0 %45
    %47 = vset.pattern.permute.xlu0 0
    %48 = vperm.xlu0 %47, %v17
    %v49 = vpop.permute.xlu0 %48
    %50 = vset.pattern.permute.xlu0 0
    %51 = vperm.xlu0 %50, %v18
    %v52 = vpop.permute.xlu0 %51
    %53 = vset.pattern.permute.xlu0 0
    %54 = vperm.xlu0 %53, %v19
    %v55 = vpop.permute.xlu0 %54
    %56 = vset.pattern.permute.xlu0 0
    %57 = vperm.xlu0 %56, %v20
    %v58 = vpop.permute.xlu0 %57
    %59 = vset.pattern.permute.xlu0 0
    %60 = vperm.xlu0 %59, %v21
    %v61 = vpop.permute.xlu0 %60
    %62 = vset.pattern.permute.xlu0 0
    %63 = vperm.xlu0 %62, %v22
    %v64 = vpop.permute.xlu0 %63
    %65 = vst [vmem:[#allocation2] sm:$0xff] %v25
    %66 = vst [vmem:[#allocation2 + $0x8] sm:$0xff] %v25
    %67 = vst [vmem:[#allocation2 + $0x10] sm:$0xff] %v28
    %68 = vst [vmem:[#allocation2 + $0x18] sm:$0xff] %v28
    %69 = vst [vmem:[#allocation2 + $0x20] sm:$0xff] %v31
    %70 = vst [vmem:[#allocation2 + $0x28] sm:$0xff] %v31
    %71 = vst [vmem:[#allocation2 + $0x30] sm:$0xff] %v34
    %72 = vst [vmem:[#allocation2 + $0x38] sm:$0xff] %v34
    %73 = vst [vmem:[#allocation2 + $0x40] sm:$0xff] %v37
    %74 = vst [vmem:[#allocation2 + $0x48] sm:$0xff] %v37
    %75 = vst [vmem:[#allocation2 + $0x50] sm:$0xff] %v40
    %76 = vst [vmem:[#allocation2 + $0x58] sm:$0xff] %v40
    %77 = vst [vmem:[#allocation2 + $0x60] sm:$0xff] %v43
    %78 = vst [vmem:[#allocation2 + $0x68] sm:$0xff] %v43
    %79 = vst [vmem:[#allocation2 + $0x70] sm:$0xff] %v46
    %80 = vst [vmem:[#allocation2 + $0x78] sm:$0xff] %v46
    %81 = vst [vmem:[#allocation2 + $0x80] sm:$0xff] %v49
    %82 = vst [vmem:[#allocation2 + $0x88] sm:$0xff] %v49
    %83 = vst [vmem:[#allocation2 + $0x90] sm:$0xff] %v52
    %84 = vst [vmem:[#allocation2 + $0x98] sm:$0xff] %v52
    %85 = vst [vmem:[#allocation2 + $0xa0] sm:$0xff] %v55
    %86 = vst [vmem:[#allocation2 + $0xa8] sm:$0xff] %v55
    %87 = vst [vmem:[#allocation2 + $0xb0] sm:$0xff] %v58
    %88 = vst [vmem:[#allocation2 + $0xb8] sm:$0xff] %v58
    %89 = vst [vmem:[#allocation2 + $0xc0] sm:$0xff] %v61
    %90 = vst [vmem:[#allocation2 + $0xc8] sm:$0xff] %v61
    %91 = vst [vmem:[#allocation2 + $0xd0] sm:$0x3f] %v64
    %92 = vst [vmem:[#allocation2 + $0xd8] sm:$0x3f] %v64
    // Predicated region
    $region6: #{tpu_custom_call.1} parent=1 // pred_check
      _
    $region7: #{tpu_custom_call.1} parent=1 // pred_check_branch
      %94 = sbr.rel (0) target = $region9
    $region8: #{tpu_custom_call.1} parent=1 // pred_region
      %s96 = ssub.s32 3584, 3584
      %97 = vsyncadd [#allocation3], %s96
      %s98 = sshll.u32 [#allocation2], 4
      %s99 = int_to_ptr.vmem [resolvable:$true] %s98
      %104 = dma.vmem_to_hbm [thread:$0]  %s99, 3584, %s1, [#allocation3], 256, 256, 16
    $region9: #{tpu_custom_call.1} parent=1 // pred_fallthru
      _
    // Predicated region
    $region10: #{tpu_custom_call.1} parent=1 // pred_check
      _
    $region11: #{tpu_custom_call.1} parent=1 // pred_check_branch
      %106 = sbr.rel (0) target = $region13
    $region12: #{tpu_custom_call.1} parent=1 // pred_region
      %107 = dma.done [#allocation3], 3584
    $region13: #{tpu_custom_call.1} parent=1 // pred_fallthru
      _
    %108 = vsyncpa [#allocation3], 1

</llo_original>
